<compile_context>
chip_gen: v7x
topology: tpu7x:2x2x1
jax: 0.10.0
libtpu: 0.0.40
codegen_flags: <defaults>
</compile_context>

<pallas_src>
import functools

import jax
import jax.numpy as jnp
from jax.experimental import pallas as pl
from jax.experimental.pallas import tpu as pltpu


def _round_up(x: int, m: int) -> int:
    return ((x + m - 1) // m) * m


def _device_kind() -> str:
    try:
        return jax.devices()[0].device_kind.lower()
    except Exception:  # pragma: no cover
        return ""


@functools.lru_cache(maxsize=None)
def _bf16_elementwise_supported() -> bool:
    """One-time probe: can Mosaic lower the focal elementwise chain on bf16 vregs?"""
    def _probe(x_ref, o_ref):
        x = x_ref[...]
        t = jnp.exp(-jnp.abs(x))
        ce = jnp.maximum(x, 0.0) - x * x + jnp.log1p(t)
        o_ref[...] = ce * (1.0 - jnp.exp(-ce))

    try:
        x = jnp.zeros((16, 128), jnp.bfloat16)
        out = pl.pallas_call(
            _probe, out_shape=jax.ShapeDtypeStruct((16, 128), jnp.bfloat16))(x)
        jax.block_until_ready(out)
        return True
    except Exception:  # pragma: no cover - depends on chip / toolchain
        return False


def _default_compute_dtype():
    kind = _device_kind()
    # v5e-and-older TensorCores have no bf16 VALU/EUP: bf16 math would only add converts.
    old_gen = any(tag in kind for tag in ("v2", "v3", "v4", "v5"))
    if old_gen or not _bf16_elementwise_supported():
        return jnp.float32
    return jnp.bfloat16


def _default_num_chunks() -> int:
    # Only multi-TensorCore chips (v7x: 2 TCs/chip) benefit from sharding the leading
    # "parallel" grid axis; on 1-TC v5e/v6e it would only add phantom tiles.
    return 2 if "7" in _device_kind() else 1


def _pick_tile(num_anchors: int, num_classes: int, logits_itemsize: int,
               labels_itemsize: int, max_rows=None):
    """Tile rows so the lane-padded logits block is ~6 MiB and the double-buffered
    input stream stays <= ~36 MiB (v7x-safe); 128-row aligned, capped at 16K rows."""
    c_pad = _round_up(max(num_classes, 1), 128)                 # lane-padded class dim
    row_stream_bytes = c_pad * (logits_itemsize + labels_itemsize) + 4  # + img_id i32
    rows_target = (6 * 1024 * 1024) // (c_pad * logits_itemsize)
    rows_cap = (36 * 1024 * 1024) // (2 * row_stream_bytes)     # 2x-buffered stream cap
    rows = max(128, min(rows_target, rows_cap, 16384))
    if max_rows is not None:
        rows = max(128, min(rows, int(max_rows)))
    rows = (rows // 128) * 128
    if num_anchors <= rows:
        return num_anchors, 1
    return rows, -(-num_anchors // rows)


def _focal_loss_kernel(logits_ref, labels_ref, img_id_ref, out_ref, acc_ref, *,
                       alpha: float, gamma: float, num_anchors: int, num_images: int,
                       compute_dtype, ragged: bool):
    tile_a = logits_ref.shape[0]
    b_pad = acc_ref.shape[0]
    step = pl.program_id(1)
    steps = pl.num_programs(1)

    @pl.when(step == 0)
    def _init():
        acc_ref[...] = jnp.zeros_like(acc_ref)

    cd = compute_dtype
    x = logits_ref[...].astype(cd)      # in-kernel cast: inputs stream in native dtype
    y = labels_ref[...].astype(cd)

    # Numerically stable BCE-with-logits: ce = max(x,0) - x*y + log1p(exp(-|x|)).
    t = jnp.exp(-jnp.abs(x))
    ce = jnp.maximum(x, 0.0) - x * y + jnp.log1p(t)

    # Hard {0,1} targets => p_t == exp(-ce); rebuild the focal modulator from ce alone
    # (no sigmoid rebuild, no x>=0 select, no reciprocal: EUP has slack, VALU does not).
    q = 1.0 - jnp.exp(-ce)                                   # == 1 - p_t

    g = float(gamma)
    if g == 2.0:
        mod = q * q
    elif g == 1.0:
        mod = q
    elif g == 0.0:
        mod = None
    elif g.is_integer() and g > 0:
        mod = q
        for _ in range(int(g) - 1):
            mod = mod * q
    else:
        mod = q ** g                                         # generic: pow = exp+log (EUP)
    loss = ce if mod is None else ce * mod
    if alpha >= 0:
        a = float(alpha)
        # alpha_t = alpha*y + (1-alpha)*(1-y) == (1-alpha) + (2*alpha-1)*y.
        loss = ((1.0 - a) + (2.0 * a - 1.0) * y) * loss

    if ragged:
        # Tail tile (A % tile_a) / phantom steps of an uneven parallel split read past A;
        # that VMEM tail is unspecified (can decode to inf/NaN), so it must be squashed
        # with a select on `loss` — folding it into the onehot operand would leave
        # 0 * non-finite = NaN in the matmul.  Statically skipped when the tiling
        # divides A evenly, so aligned workloads never pay for it.
        chunk = pl.program_id(0)
        tile_i = chunk * steps + step                         # unclamped logical tile idx
        row_ids = tile_i * tile_a + jax.lax.broadcasted_iota(jnp.int32, (tile_a, 1), 0)
        loss = jnp.where(row_ids < num_anchors, loss, 0.0)

    # Fused class-sum + scatter_add(img_id) in one small MXU matmul:
    #   onehot [B_pad, TILE_A] @ loss [TILE_A, C] -> per-image, per-class partials.
    img_id = img_id_ref[...]                                              # (1, TILE_A) i32
    b_iota = jax.lax.broadcasted_iota(jnp.int32, (b_pad, tile_a), 0)
    onehot = (b_iota == img_id).astype(cd)
    acc_ref[...] += jnp.dot(onehot, loss, preferred_element_type=jnp.float32)

    @pl.when(step == steps - 1)
    def _finalize():
        per_image = jnp.sum(acc_ref[0:num_images, :], axis=1, keepdims=True)  # (B, 1)
        out_ref[...] = per_image.reshape(out_ref.shape)                        # (1, B, 1)


def focal_loss(logits, labels, num_pos, num_assigned, *, alpha=0.25, gamma=2.0,
               max_tile_rows=None, num_chunks=None, compute_dtype=None):
    """Pallas-backed equivalent of FocalLoss.forward (returns the per-image mean)."""
    A, C = logits.shape
    B = int(num_assigned.shape[0])
    B_pad = _round_up(max(B, 1), 8)

    if compute_dtype is None:
        compute_dtype = _default_compute_dtype()

    # Scatter indices: repeat_interleave(arange(B), num_assigned) — plain-JAX glue.
    # NOTE: requires sum(num_assigned) == A (RetinaNet invariant); total_repeat_length
    # pads/truncates silently otherwise, attributing trailing anchors to the last image.
    img_id = jnp.repeat(jnp.arange(B, dtype=jnp.int32),
                        num_assigned.astype(jnp.int32),
                        total_repeat_length=A).reshape(1, A)

    logits_b = logits.dtype.itemsize
    labels_b = labels.dtype.itemsize
    tile_a, num_tiles = _pick_tile(A, C, logits_b, labels_b, max_tile_rows)

    if num_chunks is None:
        num_chunks = _default_num_chunks()
    num_chunks = max(1, min(int(num_chunks), num_tiles))
    steps = -(-num_tiles // num_chunks)
    last_tile = num_tiles - 1
    # Ragged iff a partial tail tile or a phantom step (uneven 2-TC split) exists.
    ragged = (A % tile_a != 0) or (num_chunks * steps != num_tiles)

    def tile_idx(p, s):
        # Phantom steps of an uneven split re-read the last real tile; the kernel's
        # row-validity select (ragged path) zeroes their contribution.
        return jnp.minimum(p * steps + s, last_tile)

    kernel = functools.partial(
        _focal_loss_kernel, alpha=float(alpha), gamma=float(gamma),
        num_anchors=A, num_images=B, compute_dtype=compute_dtype, ragged=ragged)

    # VMEM budget with lane-padded C and the *actual* streamed dtypes:
    # double-buffered input stream + accumulator + headroom for elementwise temporaries,
    # capped at 40 MiB so v7x's 64 MiB physical VMEM keeps scheduling headroom
    # (v5e/v6e have 128 MiB, so this cap is safe everywhere).
    c_pad = _round_up(C, 128)
    stream_bytes = tile_a * (c_pad * (logits_b + labels_b) + 4)
    acc_bytes = B_pad * c_pad * 4
    vmem_limit = int(min(40 * 1024 * 1024,
                         max(2 * stream_bytes + acc_bytes + 12 * 1024 * 1024,
                             16 * 1024 * 1024)))

    partials = pl.pallas_call(
        kernel,
        out_shape=jax.ShapeDtypeStruct((num_chunks, B, 1), jnp.float32),
        grid_spec=pltpu.PrefetchScalarGridSpec(
            num_scalar_prefetch=0,
            grid=(num_chunks, steps),
            in_specs=[
                pl.BlockSpec((tile_a, C), lambda p, s: (tile_idx(p, s), 0)),   # logits
                pl.BlockSpec((tile_a, C), lambda p, s: (tile_idx(p, s), 0)),   # labels
                pl.BlockSpec((1, tile_a), lambda p, s: (0, tile_idx(p, s))),   # img ids
            ],
            out_specs=pl.BlockSpec((1, B, 1), lambda p, s: (p, 0, 0)),
            scratch_shapes=[pltpu.VMEM((B_pad, C), jnp.float32)],
        ),
        compiler_params=pltpu.CompilerParams(
            dimension_semantics=("parallel", "arbitrary"),
            vmem_limit_bytes=vmem_limit),
    )(logits, labels, img_id)        # native dtypes — no extra HBM pass for casting

    # Tiny O(B) finalization in the wrapper (allows per-TensorCore partial outputs).
    image_losses = jnp.sum(partials, axis=0)[:, 0]                      # (B,)
    image_losses = image_losses / jnp.maximum(num_pos.astype(jnp.float32), 1.0)
    return jnp.mean(image_losses)


def _focal_loss_ref(logits, labels, num_pos, num_assigned, *, alpha=0.25, gamma=2.0):
    """Pure-JAX reference mirroring the PyTorch module."""
    x = logits.astype(jnp.float32)
    y = labels.astype(jnp.float32)
    ce = jnp.maximum(x, 0.0) - x * y + jnp.log1p(jnp.exp(-jnp.abs(x)))
    p = jax.nn.sigmoid(x)
    p_t = p * y + (1.0 - p) * (1.0 - y)
    loss = ce * (1.0 - p_t) ** gamma
    if alpha >= 0:
        loss = (alpha * y + (1.0 - alpha) * (1.0 - y)) * loss
    anchor_loss = jnp.sum(loss, axis=1)
    B = num_assigned.shape[0]
    seg = jnp.repeat(jnp.arange(B), num_assigned.astype(jnp.int32),
                     total_repeat_length=x.shape[0])
    image_losses = jax.ops.segment_sum(anchor_loss, seg, num_segments=B)
    image_losses = image_losses / jnp.maximum(num_pos.astype(jnp.float32), 1.0)
    return jnp.mean(image_losses)


if __name__ == "__main__":
    key = jax.random.PRNGKey(0)

    cd = _default_compute_dtype()
    if cd == jnp.bfloat16:
        tol = dict(rtol=3e-2, atol=1e-3)   # bf16 elementwise path (v6e / v7x)
    else:
        tol = dict(rtol=2e-3, atol=1e-6)   # f32 elementwise path (v5e and older)

    # --- Test 1: small single-tile, non-ragged path (B=2, A=16, C=8) ---
    B, A, C = 2, 16, 8
    k1, k2 = jax.random.split(key)
    logits = jax.random.normal(k1, (A, C), dtype=jnp.float32)
    labels = jax.random.bernoulli(k2, p=0.3, shape=(A, C)).astype(jnp.float32)
    num_assigned = jnp.array([10, 6], dtype=jnp.int32)          # sums to A
    num_pos = jnp.array([3.0, 0.5], dtype=jnp.float32)          # 0.5 exercises the clamp

    out = focal_loss(logits, labels, num_pos, num_assigned, alpha=0.25, gamma=2.0)
    out = jax.block_until_ready(out)
    ref = _focal_loss_ref(logits, labels, num_pos, num_assigned, alpha=0.25, gamma=2.0)
    assert jnp.allclose(out, ref, **tol), (out, ref)

    # --- Test 2: ragged tiled path + forced uneven 2-chunk split (A=296, 3 tiles) ---
    B2, A2, C2 = 3, 296, 8
    k3, k4 = jax.random.split(k2)
    logits2 = jax.random.normal(k3, (A2, C2), dtype=jnp.float32)
    labels2 = jax.random.bernoulli(k4, p=0.3, shape=(A2, C2)).astype(jnp.float32)
    num_assigned2 = jnp.array([100, 96, 100], dtype=jnp.int32)  # sums to A2
    num_pos2 = jnp.array([5.0, 0.2, 7.0], dtype=jnp.float32)

    out2 = focal_loss(logits2, labels2, num_pos2, num_assigned2, alpha=0.25, gamma=2.0,
                      max_tile_rows=128, num_chunks=2)          # force phantom-step path
    out2 = jax.block_until_ready(out2)
    ref2 = _focal_loss_ref(logits2, labels2, num_pos2, num_assigned2,
                           alpha=0.25, gamma=2.0)
    assert jnp.allclose(out2, ref2, **tol), (out2, ref2)

    # --- Test 3: narrow-dtype HBM stream (bf16 logits + bf16 labels, no wrapper casts) ---
    B3, A3, C3 = 2, 160, 16
    k5, k6 = jax.random.split(k4)
    logits3_f32 = jax.random.normal(k5, (A3, C3), dtype=jnp.float32)
    labels3_f32 = jax.random.bernoulli(k6, p=0.3, shape=(A3, C3)).astype(jnp.float32)
    num_assigned3 = jnp.array([70, 90], dtype=jnp.int32)        # sums to A3
    num_pos3 = jnp.array([4.0, 2.0], dtype=jnp.float32)

    out3 = focal_loss(logits3_f32.astype(jnp.bfloat16),         # producer-side bf16 stream
                      labels3_f32.astype(jnp.bfloat16),         # exact for hard {0,1}
                      num_pos3, num_assigned3, alpha=0.25, gamma=2.0, max_tile_rows=128)
    out3 = jax.block_until_ready(out3)
    ref3 = _focal_loss_ref(logits3_f32.astype(jnp.bfloat16).astype(jnp.float32),
                           labels3_f32, num_pos3, num_assigned3, alpha=0.25, gamma=2.0)
    assert jnp.allclose(out3, ref3, **tol), (out3, ref3)

    print("KERNEL_OK")
</pallas_src>

<mosaic_0001>
module attributes {stable_mosaic.version = 11 : i64} {
  func.func @_probe(%arg0: memref<16x128xbf16, #tpu.memory_space<vmem>>, %arg1: memref<16x128xbf16, #tpu.memory_space<vmem>>) attributes {dimension_semantics = [], scalar_prefetch = 0 : i64, scratch_operands = 0 : i64, tpu.core_type = #tpu.core_type<tc>} {
    %c0 = arith.constant 0 : index
    %c0_0 = arith.constant 0 : index
    %0 = vector.load %arg0[%c0, %c0_0] : memref<16x128xbf16, #tpu.memory_space<vmem>>, vector<16x128xbf16>
    %1 = math.absf %0 : vector<16x128xbf16>
    %cst = arith.constant 0.000000e+00 : bf16
    %2 = vector.broadcast %cst : bf16 to vector<16x128xbf16>
    %3 = arith.subf %2, %1 : vector<16x128xbf16>
    %4 = math.exp %3 : vector<16x128xbf16>
    %cst_1 = arith.constant 0.000000e+00 : bf16
    %5 = vector.broadcast %cst_1 : bf16 to vector<16x128xbf16>
    %6 = arith.maximumf %0, %5 : vector<16x128xbf16>
    %7 = arith.mulf %0, %0 : vector<16x128xbf16>
    %8 = arith.subf %6, %7 : vector<16x128xbf16>
    %9 = math.log1p %4 : vector<16x128xbf16>
    %10 = arith.addf %8, %9 : vector<16x128xbf16>
    %cst_2 = arith.constant 0.000000e+00 : bf16
    %11 = vector.broadcast %cst_2 : bf16 to vector<16x128xbf16>
    %12 = arith.subf %11, %10 : vector<16x128xbf16>
    %13 = math.exp %12 : vector<16x128xbf16>
    %cst_3 = arith.constant 1.000000e+00 : bf16
    %14 = vector.broadcast %cst_3 : bf16 to vector<16x128xbf16>
    %15 = arith.subf %14, %13 : vector<16x128xbf16>
    %16 = arith.mulf %10, %15 : vector<16x128xbf16>
    %c0_4 = arith.constant 0 : index
    %c0_5 = arith.constant 0 : index
    %17 = vector.load %arg1[%c0_4, %c0_5] : memref<16x128xbf16, #tpu.memory_space<vmem>>, vector<16x128xbf16>
    tpu.vector_store %arg1[%c0_4, %c0_5], %16 {strides = array<i32>} : memref<16x128xbf16, #tpu.memory_space<vmem>>, vector<16x128xbf16>,
    return
  }
}

module attributes {stable_mosaic.version = 11 : i64} {
  func.func @_focal_loss_kernel(%arg0: i32, %arg1: i32, %arg2: memref<16x8xf32, #tpu.memory_space<vmem>>, %arg3: memref<16x8xf32, #tpu.memory_space<vmem>>, %arg4: memref<1x16xi32, #tpu.memory_space<vmem>>, %arg5: memref<1x2x1xf32, #tpu.memory_space<vmem>>, %arg6: memref<8x8xf32, #tpu.memory_space<vmem>>) attributes {dimension_semantics = [#tpu.dimension_semantics<parallel>, #tpu.dimension_semantics<arbitrary>], iteration_bounds = array<i64: 1, 1>, scalar_prefetch = 0 : i64, scratch_operands = 1 : i64, tpu.core_type = #tpu.core_type<tc>, window_params = [{transform_indices = @transform_0, window_bounds = array<i64: 16, 8>}, {transform_indices = @transform_1, window_bounds = array<i64: 16, 8>}, {transform_indices = @transform_2, window_bounds = array<i64: 1, 16>}, {transform_indices = @transform_3, window_bounds = array<i64: 1, 2, 1>}]} {
    %c0_i32 = arith.constant 0 : i32
    %0 = arith.cmpi eq, %arg1, %c0_i32 : i32
    %1 = arith.extui %0 : i1 to i32
    %c0_i32_0 = arith.constant 0 : i32
    %2 = arith.cmpi ne, %1, %c0_i32_0 : i32
    scf.if %2 {
      %cst_18 = arith.constant 0.000000e+00 : f32
      %40 = vector.broadcast %cst_18 : f32 to vector<8x8xf32>
      %c0_19 = arith.constant 0 : index
      %c0_20 = arith.constant 0 : index
      %41 = vector.load %arg6[%c0_19, %c0_20] : memref<8x8xf32, #tpu.memory_space<vmem>>, vector<8x8xf32>
      tpu.vector_store %arg6[%c0_19, %c0_20], %40 {strides = array<i32>} : memref<8x8xf32, #tpu.memory_space<vmem>>, vector<8x8xf32>,
    } else {
    }
    %c0 = arith.constant 0 : index
    %c0_1 = arith.constant 0 : index
    %3 = vector.load %arg2[%c0, %c0_1] : memref<16x8xf32, #tpu.memory_space<vmem>>, vector<16x8xf32>
    %c0_2 = arith.constant 0 : index
    %c0_3 = arith.constant 0 : index
    %4 = vector.load %arg3[%c0_2, %c0_3] : memref<16x8xf32, #tpu.memory_space<vmem>>, vector<16x8xf32>
    %5 = math.absf %3 : vector<16x8xf32>
    %cst = arith.constant 0.000000e+00 : f32
    %6 = vector.broadcast %cst : f32 to vector<16x8xf32>
    %7 = arith.subf %6, %5 : vector<16x8xf32>
    %8 = math.exp %7 : vector<16x8xf32>
    %cst_4 = arith.constant 0.000000e+00 : f32
    %9 = vector.broadcast %cst_4 : f32 to vector<16x8xf32>
    %10 = arith.maximumf %3, %9 : vector<16x8xf32>
    %11 = arith.mulf %3, %4 : vector<16x8xf32>
    %12 = arith.subf %10, %11 : vector<16x8xf32>
    %13 = math.log1p %8 : vector<16x8xf32>
    %14 = arith.addf %12, %13 : vector<16x8xf32>
    %cst_5 = arith.constant 0.000000e+00 : f32
    %15 = vector.broadcast %cst_5 : f32 to vector<16x8xf32>
    %16 = arith.subf %15, %14 : vector<16x8xf32>
    %17 = math.exp %16 : vector<16x8xf32>
    %cst_6 = arith.constant 1.000000e+00 : f32
    %18 = vector.broadcast %cst_6 : f32 to vector<16x8xf32>
    %19 = arith.subf %18, %17 : vector<16x8xf32>
    %20 = arith.mulf %19, %19 : vector<16x8xf32>
    %21 = arith.mulf %14, %20 : vector<16x8xf32>
    %cst_7 = arith.constant -5.000000e-01 : f32
    %22 = vector.broadcast %cst_7 : f32 to vector<16x8xf32>
    %23 = arith.mulf %22, %4 : vector<16x8xf32>
    %cst_8 = arith.constant 7.500000e-01 : f32
    %24 = vector.broadcast %cst_8 : f32 to vector<16x8xf32>
    %25 = arith.addf %24, %23 : vector<16x8xf32>
    %26 = arith.mulf %25, %21 : vector<16x8xf32>
    %c0_9 = arith.constant 0 : index
    %c0_10 = arith.constant 0 : index
    %27 = vector.load %arg4[%c0_9, %c0_10] : memref<1x16xi32, #tpu.memory_space<vmem>>, vector<1x16xi32>
    %28 = tpu.iota {dimensions = array<i32: 0>} : vector<8x16xi32>
    %29 = vector.broadcast %27 : vector<1x16xi32> to vector<8x16xi32>
    %30 = arith.cmpi eq, %28, %29 : vector<8x16xi32>
    %31 = arith.extui %30 : vector<8x16xi1> to vector<8x16xi32>
    %32 = arith.sitofp %31 : vector<8x16xi32> to vector<8x16xf32>
    %c0_11 = arith.constant 0 : index
    %c0_12 = arith.constant 0 : index
    %33 = vector.load %arg6[%c0_11, %c0_12] : memref<8x8xf32, #tpu.memory_space<vmem>>, vector<8x8xf32>
    %cst_13 = arith.constant dense<0.000000e+00> : vector<8x8xf32>
    %34 = tpu.matmul %32, %26, %cst_13 {dimension_numbers = #tpu.dot_dimension_numbers<[1], [0], [0], [1], [0, 0, 1, 1], [], []>} : vector<8x16xf32>, vector<16x8xf32>, vector<8x8xf32> -> vector<8x8xf32>
    %35 = arith.addf %33, %34 : vector<8x8xf32>
    %c0_14 = arith.constant 0 : index
    %c0_15 = arith.constant 0 : index
    %36 = vector.load %arg6[%c0_14, %c0_15] : memref<8x8xf32, #tpu.memory_space<vmem>>, vector<8x8xf32>
    tpu.vector_store %arg6[%c0_14, %c0_15], %35 {strides = array<i32>} : memref<8x8xf32, #tpu.memory_space<vmem>>, vector<8x8xf32>,
    %c0_i32_16 = arith.constant 0 : i32
    %37 = arith.cmpi eq, %arg1, %c0_i32_16 : i32
    %38 = arith.extui %37 : i1 to i32
    %c0_i32_17 = arith.constant 0 : i32
    %39 = arith.cmpi ne, %38, %c0_i32_17 : i32
    scf.if %39 {
      %c0_18 = arith.constant 0 : index
      %c0_19 = arith.constant 0 : index
      %40 = vector.load %arg6[%c0_18, %c0_19] : memref<8x8xf32, #tpu.memory_space<vmem>>, vector<2x8xf32>
      %cst_20 = arith.constant dense<0.000000e+00> : vector<2xf32>
      %41 = vector.multi_reduction <add>, %40, %cst_20 [1] : vector<2x8xf32> to vector<2xf32>
      %42 = vector.shape_cast %41 : vector<2xf32> to vector<2x1xf32>
      %43 = vector.shape_cast %42 : vector<2x1xf32> to vector<1x2x1xf32>
      %c0_21 = arith.constant 0 : index
      %c0_22 = arith.constant 0 : index
      %c0_23 = arith.constant 0 : index
      %44 = vector.load %arg5[%c0_21, %c0_22, %c0_23] : memref<1x2x1xf32, #tpu.memory_space<vmem>>, vector<1x2x1xf32>
      tpu.vector_store %arg5[%c0_21, %c0_22, %c0_23], %43 {strides = array<i32>} : memref<1x2x1xf32, #tpu.memory_space<vmem>>, vector<1x2x1xf32>,
    } else {
    }
    return
  }
  func.func @transform_0(%arg0: i32, %arg1: i32) -> (i32, i32) {
    %c1_i32 = arith.constant 1 : i32
    %0 = arith.muli %arg0, %c1_i32 : i32
    %1 = arith.addi %0, %arg1 : i32
    %c0_i32 = arith.constant 0 : i32
    %2 = arith.minsi %1, %c0_i32 : i32
    %c0_i32_0 = arith.constant 0 : i32
    %c0_i32_1 = arith.constant 0 : i32
    return %2, %c0_i32_0 : i32, i32
  }
  func.func @transform_1(%arg0: i32, %arg1: i32) -> (i32, i32) {
    %c1_i32 = arith.constant 1 : i32
    %0 = arith.muli %arg0, %c1_i32 : i32
    %1 = arith.addi %0, %arg1 : i32
    %c0_i32 = arith.constant 0 : i32
    %2 = arith.minsi %1, %c0_i32 : i32
    %c0_i32_0 = arith.constant 0 : i32
    %c0_i32_1 = arith.constant 0 : i32
    return %2, %c0_i32_0 : i32, i32
  }
  func.func @transform_2(%arg0: i32, %arg1: i32) -> (i32, i32) {
    %c1_i32 = arith.constant 1 : i32
    %0 = arith.muli %arg0, %c1_i32 : i32
    %1 = arith.addi %0, %arg1 : i32
    %c0_i32 = arith.constant 0 : i32
    %2 = arith.minsi %1, %c0_i32 : i32
    %c0_i32_0 = arith.constant 0 : i32
    %c0_i32_1 = arith.constant 0 : i32
    return %c0_i32_0, %2 : i32, i32
  }
  func.func @transform_3(%arg0: i32, %arg1: i32) -> (i32, i32, i32) {
    %c0_i32 = arith.constant 0 : i32
    %c0_i32_0 = arith.constant 0 : i32
    %c0_i32_1 = arith.constant 0 : i32
    return %arg0, %c0_i32, %c0_i32_0 : i32, i32, i32
  }
}

</mosaic_0001>

<llo_original>
// kernel: tpu_custom_call.1
$region0: #{tpu_custom_call.1}
  #allocation0 [shape = 'u32[]', space=smem, size = 0x4, offset = 0x4, fixed_abs, tag = 'smem constant byte address 0x4 - core index']
  #allocation1 [shape = 'u32[144,128]{1,0:T(1,128)}', space=vmem, size = 0x12000, scoped, tag = 'internal scratch']
  #allocation2 [shape = 'f32[8,8]{1,0:T(8,128)}', space=vmem, size = 0x1000, scoped, tag = 'scratch operand']
  %s0 = inlined_call_operand.vmem [shape: f32[16,8], index: 0, kind: input, shape index: {}]
  %s1 = inlined_call_operand.vmem [shape: f32[16,8], index: 1, kind: input, shape index: {}]
  %s2 = inlined_call_operand.vmem [shape: s32[1,16], index: 2, kind: input, shape index: {}]
  %s3 = inlined_call_operand.vmem [shape: f32[1,2,1], index: 3, kind: output, shape index: {}]
  %s4 = sld [smem:[#allocation0]]
  $region30: #{tpu_custom_call.1} parent=0
    _
  %s6 = ssub.s32 1, %s4
  %s7 = scalar_select 0, %s6, %s4
  // Predicated region
  $region2: #{tpu_custom_call.1} parent=0 // pred_check
    _
  $region3: #{tpu_custom_call.1} parent=0 // pred_check_branch
    %9 = sbr.rel (0) target = $region5
  $region4: #{tpu_custom_call.1} parent=0 // pred_region
    %s10 = sadd.s32 0, 0
    %p11 = scmp.lt.s32.totalorder %s10, 0
    %s12 = scalar_select %p11, %s10, 0
    %s13 = smul.u32 2, %s12
    %p14 = scmp.lt.s32.totalorder %s13, 1
    %s15 = scalar_select %p14, %s13, 1
    %s16 = smul.addr %s15, 8
    %s17 = scalar_lea.vmem %s0, %s16
    %s18 = sadd.s32 0, 0
    %p19 = scmp.lt.s32.totalorder %s18, 0
    %s20 = scalar_select %p19, %s18, 0
    %s21 = smul.u32 2, %s20
  $region5: #{tpu_custom_call.1} parent=0 // pred_fallthru
    _
  // Predicated region
  $region6: #{tpu_custom_call.1} parent=0 // pred_check
    _
  $region7: #{tpu_custom_call.1} parent=0 // pred_check_branch
    %23 = sbr.rel (0) target = $region9
  $region8: #{tpu_custom_call.1} parent=0 // pred_region
    %s24 = sadd.s32 0, 0
    %p25 = scmp.lt.s32.totalorder %s24, 0
    %s26 = scalar_select %p25, %s24, 0
    %s27 = smul.u32 2, %s26
    %p28 = scmp.lt.s32.totalorder %s27, 1
    %s29 = scalar_select %p28, %s27, 1
    %s30 = smul.addr %s29, 8
    %s31 = scalar_lea.vmem %s1, %s30
    %s32 = sadd.s32 0, 0
    %p33 = scmp.lt.s32.totalorder %s32, 0
    %s34 = scalar_select %p33, %s32, 0
    %s35 = smul.u32 2, %s34
  $region9: #{tpu_custom_call.1} parent=0 // pred_fallthru
    _
  // Predicated region
  $region10: #{tpu_custom_call.1} parent=0 // pred_check
    _
  $region11: #{tpu_custom_call.1} parent=0 // pred_check_branch
    %37 = sbr.rel (0) target = $region13
  $region12: #{tpu_custom_call.1} parent=0 // pred_region
    %s38 = sadd.s32 0, 0
    %p39 = scmp.lt.s32.totalorder %s38, 0
    %s40 = scalar_select %p39, %s38, 0
    %p41 = scmp.lt.s32.totalorder %s40, 0
    %s42 = scalar_select %p41, %s40, 0
    %s43 = scalar_lea.vmem %s2, %s42
    %s44 = sadd.s32 0, 0
    %p45 = scmp.lt.s32.totalorder %s44, 0
    %s46 = scalar_select %p45, %s44, 0
  $region13: #{tpu_custom_call.1} parent=0 // pred_fallthru
    _
  %s47 = sadd.s32 0, 0
  %p48 = scmp.lt.s32.totalorder %s47, 0
  %s49 = scalar_select %p48, %s47, 0
  %s50 = smul.u32 2, %s49
  %p51 = scmp.lt.s32.totalorder %s50, 1
  %s52 = scalar_select %p51, %s50, 1
  %s53 = smul.addr %s52, 8
  %s54 = scalar_lea.vmem %s0, %s53
  %s55 = sadd.s32 0, 0
  %p56 = scmp.lt.s32.totalorder %s55, 0
  %s57 = scalar_select %p56, %s55, 0
  %s58 = smul.u32 2, %s57
  %p59 = scmp.lt.s32.totalorder %s58, 1
  %s60 = scalar_select %p59, %s58, 1
  %s61 = smul.addr %s60, 8
  %s62 = scalar_lea.vmem %s1, %s61
  %s63 = sadd.s32 0, 0
  %p64 = scmp.lt.s32.totalorder %s63, 0
  %s65 = scalar_select %p64, %s63, 0
  %p66 = scmp.lt.s32.totalorder %s65, 0
  %s67 = scalar_select %p66, %s65, 0
  %s68 = scalar_lea.vmem %s2, %s67
  %s69 = sadd.s32 0, 0
  %p70 = scmp.lt.s32.totalorder %s69, 0
  %s71 = scalar_select %p70, %s69, 0
  %s72 = smul.u32 2, %s71
  %p73 = scmp.lt.s32.totalorder %s72, 1
  %s74 = scalar_select %p73, %s72, 1
  %s75 = smul.addr %s74, 8
  %s76 = scalar_lea.vmem %s0, %s75
  %s77 = sadd.s32 0, 0
  %p78 = scmp.lt.s32.totalorder %s77, 0
  %s79 = scalar_select %p78, %s77, 0
  %s80 = smul.u32 2, %s79
  %s81 = sadd.s32 0, 0
  %p82 = scmp.lt.s32.totalorder %s81, 0
  %s83 = scalar_select %p82, %s81, 0
  %s84 = smul.u32 2, %s83
  %p85 = scmp.lt.s32.totalorder %s84, 1
  %s86 = scalar_select %p85, %s84, 1
  %s87 = smul.addr %s86, 8
  %s88 = scalar_lea.vmem %s1, %s87
  %s89 = sadd.s32 0, 0
  %p90 = scmp.lt.s32.totalorder %s89, 0
  %s91 = scalar_select %p90, %s89, 0
  %s92 = smul.u32 2, %s91
  %s93 = sadd.s32 0, 0
  %p94 = scmp.lt.s32.totalorder %s93, 0
  %s95 = scalar_select %p94, %s93, 0
  %p96 = scmp.lt.s32.totalorder %s95, 0
  %s97 = scalar_select %p96, %s95, 0
  %s98 = scalar_lea.vmem %s2, %s97
  %s99 = sadd.s32 0, 0
  %p100 = scmp.lt.s32.totalorder %s99, 0
  %s101 = scalar_select %p100, %s99, 0
  %p102 = scmp.eq.s32.totalorder 0, 0
  // Predicated region
  $region14: #{tpu_custom_call.1} parent=0 // pred_check
    %p103 = pneg %p102
  $region15: #{tpu_custom_call.1} parent=0 // pred_check_branch
    %105 = sbr.rel (%p103) target = $region17
  $region16: #{tpu_custom_call.1} parent=0 // pred_region
    %vm106 = vcmask 64512
    %107 = vst.msk [vmem:[#allocation2] sm:$0xff] %vm106, 0.0
  $region17: #{tpu_custom_call.1} parent=0 // pred_fallthru
    _
  %v108 = vld [vmem:[%s76] sm:$0xff]
  %v109 = vld [vmem:[%s76 + $0x8] sm:$0xff]
  %v110 = vld [vmem:[%s88] sm:$0xff]
  %v111 = vld [vmem:[%s88 + $0x8] sm:$0xff]
  %v112 = vand.u32 2147483647, %v108
  %v113 = vand.u32 2147483647, %v109
  %v114 = vsub.f32 0.0, %v112
  %v115 = vsub.f32 0.0, %v113
  %v116 = vmul.f32 %v114, 1.442695
  %v117 = vpow.pop %v116
  %v118 = vmul.f32 %v115, 1.442695
  %v119 = vpow.pop %v118
  %v120 = vmax.f32 %v108, 0.0
  %v121 = vmax.f32 %v109, 0.0
  %v122 = vmul.f32 %v108, %v110
  %v123 = vmul.f32 %v109, %v111
  %v124 = vsub.f32 %v120, %v122
  %v125 = vsub.f32 %v121, %v123
  %v126 = vadd.f32 %v117, 1.0
  %v127 = vlog2.pop %v126
  %v128 = vmul.f32 %v127, 0.6931472
  %v129 = vmul.f32 -0.5, %v117
  %v130 = vadd.f32 %v129, 1.0
  %v131 = vmul.f32 %v130, %v117
  %v132 = vand.u32 2147483647, %v117
  %vm133 = vcmp.lt.f32.partialorder %v132, 0.0004427343
  %v134 = vsel %vm133, %v131, %v128
  %v135 = vadd.f32 %v119, 1.0
  %v136 = vlog2.pop %v135
  %v137 = vmul.f32 %v136, 0.6931472
  %v138 = vmul.f32 -0.5, %v119
  %v139 = vadd.f32 %v138, 1.0
  %v140 = vmul.f32 %v139, %v119
  %v141 = vand.u32 2147483647, %v119
  %vm142 = vcmp.lt.f32.partialorder %v141, 0.0004427343
  %v143 = vsel %vm142, %v140, %v137
  %v144 = vadd.f32 %v124, %v134
  %v145 = vadd.f32 %v125, %v143
  %v146 = vsub.f32 0.0, %v144
  %v147 = vsub.f32 0.0, %v145
  %v148 = vmul.f32 %v146, 1.442695
  %v149 = vpow.pop %v148
  %v150 = vmul.f32 %v147, 1.442695
  %v151 = vpow.pop %v150
  %v152 = vsub.f32 1.0, %v149
  %v153 = vsub.f32 1.0, %v151
  %v154 = vmul.f32 %v152, %v152
  %v155 = vmul.f32 %v153, %v153
  %v156 = vmul.f32 %v144, %v154
  %v157 = vmul.f32 %v145, %v155
  %v158 = vmul.f32 %v110, -0.5
  %v159 = vmul.f32 %v111, -0.5
  %v160 = vadd.f32 %v158, 0.75
  %v161 = vadd.f32 %v159, 0.75
  %v162 = vmul.f32 %v160, %v156
  %v163 = vmul.f32 %v161, %v157
  %v164 = vld [vmem:[%s98] sm:$0x1]
  %v165 = vlaneseq
  %v166 = vshrl.u32 %v165, 7
  %v167 = vlaneseq
  %v168 = vshrl.u32 %v167, 7
  %v169 = vsub.s32 0, %v168
  %v170 = vrot.slane %v164, %v169
  %vm171 = vcmp.eq.s32.totalorder %v166, %v170
  %v172 = vsel %vm171, 1, 0
  %v173 = vcvt.s32.f32 %v172
  %v174 = vld [vmem:[#allocation2] sm:$0xff]
  %vm175 = vcmask 130048
  %v177 = vsel %vm175, %v173, 0
  %179 = vmatprep.subr.mxu0 0.0
  %180 = vmatpush1.msra.mxu0 %v162
  %181 = vmatprep.subr.mxu0 0.0
  %182 = vmatpush1.msra.mxu0 %v163
  %183 = vmatprep.subr.mxu0 0.0
  %184 = vmatpush1.msra.mxu0 0.0
  %185 = vmatprep.subr.mxu0 0.0
  %186 = vmatpush1.msra.mxu0 0.0
  %187 = vmatprep.subr.mxu0 0.0
  %188 = vmatpush1.msra.mxu0 0.0
  %189 = vmatprep.subr.mxu0 0.0
  %190 = vmatpush1.msra.mxu0 0.0
  %191 = vmatprep.subr.mxu0 0.0
  %192 = vmatpush1.msra.mxu0 0.0
  %193 = vmatprep.subr.mxu0 0.0
  %194 = vmatpush1.msra.mxu0 0.0
  %195 = vmatprep.subr.mxu0 0.0
  %196 = vmatpush1.msra.mxu0 0.0
  %197 = vmatprep.subr.mxu0 0.0
  %198 = vmatpush1.msra.mxu0 0.0
  %199 = vmatprep.subr.mxu0 0.0
  %200 = vmatpush1.msra.mxu0 0.0
  %201 = vmatprep.subr.mxu0 0.0
  %202 = vmatpush1.msra.mxu0 0.0
  %203 = vmatprep.subr.mxu0 0.0
  %204 = vmatpush1.msra.mxu0 0.0
  %205 = vmatprep.subr.mxu0 0.0
  %206 = vmatpush1.msra.mxu0 0.0
  %207 = vmatprep.subr.mxu0 0.0
  %208 = vmatpush1.msra.mxu0 0.0
  %209 = vmatprep.subr.mxu0 0.0
  %210 = vmatpush1.msra.mxu0 0.0
  %211 = vmatprep.subr.mxu0 0.0
  %212 = vmatpush1.msra.mxu0 0.0
  %213 = vmatprep.subr.mxu0 0.0
  %214 = vmatpush1.msra.mxu0 0.0
  %215 = vmatprep.subr.mxu0 0.0
  %216 = vmatpush1.msra.mxu0 0.0
  %217 = vmatprep.subr.mxu0 0.0
  %218 = vmatpush1.msra.mxu0 0.0
  %219 = vmatprep.subr.mxu0 0.0
  %220 = vmatpush1.msra.mxu0 0.0
  %221 = vmatprep.subr.mxu0 0.0
  %222 = vmatpush1.msra.mxu0 0.0
  %223 = vmatprep.subr.mxu0 0.0
  %224 = vmatpush1.msra.mxu0 0.0
  %225 = vmatprep.subr.mxu0 0.0
  %226 = vmatpush1.msra.mxu0 0.0
  %227 = vmatprep.subr.mxu0 0.0
  %228 = vmatpush1.msra.mxu0 0.0
  %229 = vmatprep.subr.mxu0 0.0
  %230 = vmatpush1.msra.mxu0 0.0
  %231 = vmatprep.subr.mxu0 0.0
  %232 = vmatpush1.msra.mxu0 0.0
  %233 = vmatprep.subr.mxu0 0.0
  %234 = vmatpush1.msra.mxu0 0.0
  %235 = vmatprep.subr.mxu0 0.0
  %236 = vmatpush1.msra.mxu0 0.0
  %237 = vmatprep.subr.mxu0 0.0
  %238 = vmatpush1.msra.mxu0 0.0
  %239 = vmatprep.subr.mxu0 0.0
  %240 = vmatpush1.msra.mxu0 0.0
  %241 = vmatprep.subr.mxu0 0.0
  %242 = vmatpush1.msra.mxu0 0.0
  %243 = vmatprep.mubr.f32.mxu0 0.0
  %244 = vmatmul.mubr.f32.gmra.mrb[0].mxu0 %v177
  %v245 = vpop.f32.mrb[0].mxu0
  %v246 = vadd.f32 0.0, %v245
  %v247 = vpop.f32.mrb[0].mxu0
  %248 = vdwg.mxu0
  %v249 = vadd.f32 %v174, %v246
  %vm250 = vcmask 64512
  %251 = vst.msk [vmem:[#allocation2] sm:$0xff] %vm250, %v249
  // Predicated region
  $region18: #{tpu_custom_call.1} parent=0 // pred_check
    %p252 = pneg %p102
  $region19: #{tpu_custom_call.1} parent=0 // pred_check_branch
    %254 = sbr.rel (%p252) target = $region21
  $region20: #{tpu_custom_call.1} parent=0 // pred_region
    %v255 = vld [vmem:[#allocation2] sm:$0x3]
    %vm256 = vcmask 58368
    %v257 = vsel %vm256, %v255, 0.0
    %258 = vadd.xlane.f32.xlu0 %v257
    %v259 = vpop.xlane.xlu0 %258
    %vm260 = vcmask 1024
    %261 = vst.msk [vmem:[%s3] sm:$0x3] %vm260, %v259
  $region21: #{tpu_custom_call.1} parent=0 // pred_fallthru
    _
  // Predicated region
  $region22: #{tpu_custom_call.1} parent=0 // pred_check
    _
  $region23: #{tpu_custom_call.1} parent=0 // pred_check_branch
    %263 = sbr.rel (0) target = $region25
  $region24: #{tpu_custom_call.1} parent=0 // pred_region
    _
  $region25: #{tpu_custom_call.1} parent=0 // pred_fallthru
    _
  // Predicated region
  $region26: #{tpu_custom_call.1} parent=0 // pred_check
    _
  $region27: #{tpu_custom_call.1} parent=0 // pred_check_branch
    %265 = sbr.rel (0) target = $region29
  $region28: #{tpu_custom_call.1} parent=0 // pred_region
    _
  $region29: #{tpu_custom_call.1} parent=0 // pred_fallthru
    _

</llo_original>
